<compile_context>
chip_gen: v7x
topology: tpu7x:2x2x1
jax: 0.10.0
libtpu: 0.0.40
codegen_flags: <defaults>
</compile_context>

<pallas_src>
from functools import partial

import jax
import jax.numpy as jnp
from jax.experimental import pallas as pl
from jax.experimental.pallas import tpu as pltpu

_SUBLANE = 8
_LANE = 128


def _round_up(x, m):
    return ((x + m - 1) // m) * m


def _contrastive_kernel(o1_ref, o2_ref, label_ref, out_ref, *, margin, eps, batch, tile_b):
    i = pl.program_id(0)

    # Elementwise difference (+ eps, matching F.pairwise_distance default).
    diff = o1_ref[...].astype(jnp.float32) - o2_ref[...].astype(jnp.float32) + eps
    # Per-row squared L2 distance -> (tile_b, 1)  (XLU cross-lane reduce).
    sq_dist = jnp.sum(diff * diff, axis=-1, keepdims=True)
    dist = jnp.sqrt(sq_dist)                               # EUP

    lbl = label_ref[...].astype(jnp.float32)               # (tile_b, 1)
    hinge = jnp.maximum(margin - dist, 0.0)
    per_row = (1.0 - lbl) * sq_dist + lbl * (hinge * hinge)

    # Mask rows beyond the true batch so padding contributes exactly 0.
    row_ids = i * tile_b + jax.lax.broadcasted_iota(jnp.int32, (tile_b, 1), 0)
    per_row = jnp.where(row_ids < batch, per_row, 0.0)

    tile_sum = jnp.sum(per_row, axis=0, keepdims=True)     # (1, 1)
    # Dense, unmasked (8, 128) store; wrapper reads [i, 0, 0].
    out_ref[...] = jnp.broadcast_to(tile_sum, (_SUBLANE, _LANE))


def contrastive_loss(output1, output2, label, margin=2.0, eps=1e-6, tile_rows=None):
    """output1, output2: (B, D) float32/bfloat16; label: (B, 1). Scalar f32 loss."""
    B, D = output1.shape
    assert output2.shape == (B, D)
    assert label.shape == (B, 1)

    itemsize = jnp.dtype(output1.dtype).itemsize
    if tile_rows is None:
        # Target ~4 MiB per (tile_rows, D) input tile, capped at 1024 rows.
        tile_rows = (4 * 1024 * 1024) // max(1, D * itemsize)
        tile_rows = max(_SUBLANE, min(1024, (tile_rows // _SUBLANE) * _SUBLANE))
    else:
        tile_rows = max(_SUBLANE, _round_up(int(tile_rows), _SUBLANE))
    # Never bigger than the (sublane-rounded) batch itself.
    tile_rows = min(tile_rows, _round_up(B, _SUBLANE))

    n_tiles = pl.cdiv(B, tile_rows)
    b_pad = n_tiles * tile_rows
    if b_pad != B:
        pad = ((0, b_pad - B), (0, 0))
        output1 = jnp.pad(output1, pad)
        output2 = jnp.pad(output2, pad)
        label = jnp.pad(label, pad)

    kernel = partial(
        _contrastive_kernel,
        margin=float(margin), eps=float(eps), batch=B, tile_b=tile_rows,
    )

    partials = pl.pallas_call(
        kernel,
        out_shape=jax.ShapeDtypeStruct((n_tiles, _SUBLANE, _LANE), jnp.float32),
        grid_spec=pltpu.PrefetchScalarGridSpec(
            num_scalar_prefetch=0,
            grid=(n_tiles,),
            in_specs=[
                pl.BlockSpec((tile_rows, D), lambda i: (i, 0)),
                pl.BlockSpec((tile_rows, D), lambda i: (i, 0)),
                pl.BlockSpec((tile_rows, 1), lambda i: (i, 0)),
            ],
            out_specs=pl.BlockSpec((None, _SUBLANE, _LANE), lambda i: (i, 0, 0)),
        ),
        compiler_params=pltpu.CompilerParams(
            dimension_semantics=("parallel",),          # v7x: split tiles across 2 TCs
            vmem_limit_bytes=48 * 1024 * 1024,          # explicit; fits v5e/v6e/v7x
        ),
        cost_estimate=pl.CostEstimate(
            flops=4 * B * D + 8 * B,
            transcendentals=B,
            bytes_accessed=(2 * B * D + B) * itemsize + n_tiles * _SUBLANE * _LANE * 4,
        ),
    )(output1, output2, label)

    # Tiny final reduce (one f32 per tile) + the single divide-by-B in XLA.
    return jnp.sum(partials[:, 0, 0]) / jnp.float32(B)


def contrastive_loss_ref(output1, output2, label, margin=2.0, eps=1e-6):
    """Pure-JAX reference mirroring the PyTorch module."""
    diff = output1.astype(jnp.float32) - output2.astype(jnp.float32) + eps
    dist = jnp.sqrt(jnp.sum(diff * diff, axis=-1, keepdims=True))  # (B, 1)
    lbl = label.astype(jnp.float32)
    return jnp.mean((1.0 - lbl) * dist**2 + lbl * jnp.clip(margin - dist, 0.0) ** 2)


if __name__ == "__main__":
    key = jax.random.PRNGKey(0)

    # Case 1: small shapes consistent with the module (batch=8, hidden=32).
    k1, k2, k3, k4, k5, k6 = jax.random.split(key, 6)
    B, D = 8, 32
    o1 = jax.random.normal(k1, (B, D), dtype=jnp.float32)
    o2 = jax.random.normal(k2, (B, D), dtype=jnp.float32)
    y = jax.random.bernoulli(k3, p=0.5, shape=(B, 1)).astype(jnp.float32)
    loss = jax.block_until_ready(contrastive_loss(o1, o2, y, margin=2.0))
    ref = contrastive_loss_ref(o1, o2, y, margin=2.0)
    assert jnp.allclose(loss, ref, rtol=1e-5, atol=1e-5), (loss, ref)

    # Case 2: non-multiple-of-tile batch with a small forced tile -> exercises
    # the multi-tile grid, pipelining and the padded-row mask.
    B2, D2 = 300, 32
    o1b = jax.random.normal(k4, (B2, D2), dtype=jnp.float32)
    o2b = jax.random.normal(k5, (B2, D2), dtype=jnp.float32)
    yb = jax.random.bernoulli(k6, p=0.5, shape=(B2, 1)).astype(jnp.float32)
    loss2 = jax.block_until_ready(contrastive_loss(o1b, o2b, yb, margin=2.0, tile_rows=64))
    ref2 = contrastive_loss_ref(o1b, o2b, yb, margin=2.0)
    assert jnp.allclose(loss2, ref2, rtol=1e-5, atol=1e-5), (loss2, ref2)

    # Case 3: bf16 embeddings (halves HBM traffic); kernel computes in f32.
    o1c = o1b[:64].astype(jnp.bfloat16)
    o2c = o2b[:64].astype(jnp.bfloat16)
    yc = yb[:64]
    loss3 = jax.block_until_ready(contrastive_loss(o1c, o2c, yc, margin=2.0))
    ref3 = contrastive_loss_ref(o1c, o2c, yc, margin=2.0)
    assert jnp.allclose(loss3, ref3, rtol=1e-5, atol=1e-5), (loss3, ref3)

    print("KERNEL_OK")
</pallas_src>

<mosaic_0001>
module attributes {stable_mosaic.version = 11 : i64} {
  func.func @_contrastive_kernel(%arg0: i32, %arg1: memref<8x32xf32, #tpu.memory_space<vmem>>, %arg2: memref<8x32xf32, #tpu.memory_space<vmem>>, %arg3: memref<8x1xf32, #tpu.memory_space<vmem>>, %arg4: memref<1x8x128xf32, #tpu.memory_space<vmem>>) attributes {dimension_semantics = [#tpu.dimension_semantics<parallel>], iteration_bounds = array<i64: 1>, scalar_prefetch = 0 : i64, scratch_operands = 0 : i64, tpu.core_type = #tpu.core_type<tc>, window_params = [{transform_indices = @transform_0, window_bounds = array<i64: 8, 32>}, {transform_indices = @transform_1, window_bounds = array<i64: 8, 32>}, {transform_indices = @transform_2, window_bounds = array<i64: 8, 1>}, {transform_indices = @transform_3, window_bounds = array<i64: 1, 8, 128>}]} {
    %c0 = arith.constant 0 : index
    %c0_0 = arith.constant 0 : index
    %0 = vector.load %arg1[%c0, %c0_0] : memref<8x32xf32, #tpu.memory_space<vmem>>, vector<8x32xf32>
    %c0_1 = arith.constant 0 : index
    %c0_2 = arith.constant 0 : index
    %1 = vector.load %arg2[%c0_1, %c0_2] : memref<8x32xf32, #tpu.memory_space<vmem>>, vector<8x32xf32>
    %2 = arith.subf %0, %1 : vector<8x32xf32>
    %cst = arith.constant 9.99999997E-7 : f32
    %3 = vector.broadcast %cst : f32 to vector<8x32xf32>
    %4 = arith.addf %2, %3 : vector<8x32xf32>
    %5 = arith.mulf %4, %4 : vector<8x32xf32>
    %cst_3 = arith.constant dense<0.000000e+00> : vector<8xf32>
    %6 = vector.multi_reduction <add>, %5, %cst_3 [1] : vector<8x32xf32> to vector<8xf32>
    %7 = vector.shape_cast %6 : vector<8xf32> to vector<8x1xf32>
    %8 = math.sqrt %7 : vector<8x1xf32>
    %c0_4 = arith.constant 0 : index
    %c0_5 = arith.constant 0 : index
    %9 = vector.load %arg3[%c0_4, %c0_5] : memref<8x1xf32, #tpu.memory_space<vmem>>, vector<8x1xf32>
    %cst_6 = arith.constant 2.000000e+00 : f32
    %10 = vector.broadcast %cst_6 : f32 to vector<8x1xf32>
    %11 = arith.subf %10, %8 : vector<8x1xf32>
    %cst_7 = arith.constant 0.000000e+00 : f32
    %12 = vector.broadcast %cst_7 : f32 to vector<8x1xf32>
    %13 = arith.maximumf %11, %12 : vector<8x1xf32>
    %cst_8 = arith.constant 1.000000e+00 : f32
    %14 = vector.broadcast %cst_8 : f32 to vector<8x1xf32>
    %15 = arith.subf %14, %9 : vector<8x1xf32>
    %16 = arith.mulf %15, %7 : vector<8x1xf32>
    %17 = arith.mulf %13, %13 : vector<8x1xf32>
    %18 = arith.mulf %9, %17 : vector<8x1xf32>
    %19 = arith.addf %16, %18 : vector<8x1xf32>
    %c8_i32 = arith.constant 8 : i32
    %20 = arith.muli %arg0, %c8_i32 : i32
    %21 = tpu.iota {dimensions = array<i32: 0>} : vector<8x1xi32>
    %22 = vector.broadcast %20 : i32 to vector<8x1xi32>
    %23 = arith.addi %22, %21 : vector<8x1xi32>
    %c8_i32_9 = arith.constant 8 : i32
    %24 = vector.broadcast %c8_i32_9 : i32 to vector<8x1xi32>
    %25 = arith.cmpi slt, %23, %24 : vector<8x1xi32>
    %cst_10 = arith.constant 0.000000e+00 : f32
    %26 = vector.broadcast %cst_10 : f32 to vector<8x1xf32>
    %27 = arith.select %25, %19, %26 : vector<8x1xi1>, vector<8x1xf32>
    %cst_11 = arith.constant dense<0.000000e+00> : vector<1xf32>
    %28 = vector.multi_reduction <add>, %27, %cst_11 [0] : vector<8x1xf32> to vector<1xf32>
    %29 = vector.shape_cast %28 : vector<1xf32> to vector<1x1xf32>
    %30 = vector.shape_cast %29 : vector<1x1xf32> to vector<1x1xf32>
    %31 = vector.broadcast %30 : vector<1x1xf32> to vector<8x128xf32>
    %c0_12 = arith.constant 0 : index
    %c0_13 = arith.constant 0 : index
    %c0_14 = arith.constant 0 : index
    %32 = vector.load %arg4[%c0_12, %c0_13, %c0_14] : memref<1x8x128xf32, #tpu.memory_space<vmem>>, vector<1x8x128xf32>
    %33 = vector.shape_cast %32 : vector<1x8x128xf32> to vector<8x128xf32>
    %34 = vector.shape_cast %31 : vector<8x128xf32> to vector<1x8x128xf32>
    tpu.vector_store %arg4[%c0_12, %c0_13, %c0_14], %34 {strides = array<i32>} : memref<1x8x128xf32, #tpu.memory_space<vmem>>, vector<1x8x128xf32>,
    return
  }
  func.func @transform_0(%arg0: i32) -> (i32, i32) {
    %c0_i32 = arith.constant 0 : i32
    %c0_i32_0 = arith.constant 0 : i32
    return %arg0, %c0_i32 : i32, i32
  }
  func.func @transform_1(%arg0: i32) -> (i32, i32) {
    %c0_i32 = arith.constant 0 : i32
    %c0_i32_0 = arith.constant 0 : i32
    return %arg0, %c0_i32 : i32, i32
  }
  func.func @transform_2(%arg0: i32) -> (i32, i32) {
    %c0_i32 = arith.constant 0 : i32
    %c0_i32_0 = arith.constant 0 : i32
    return %arg0, %c0_i32 : i32, i32
  }
  func.func @transform_3(%arg0: i32) -> (i32, i32, i32) {
    %c0_i32 = arith.constant 0 : i32
    %c0_i32_0 = arith.constant 0 : i32
    %c0_i32_1 = arith.constant 0 : i32
    return %arg0, %c0_i32, %c0_i32_0 : i32, i32, i32
  }
}

</mosaic_0001>

<llo_original>
// kernel: tpu_custom_call.1
$region0: #{tpu_custom_call.1}
  #allocation0 [shape = 'u32[]', space=smem, size = 0x4, offset = 0x4, fixed_abs, tag = 'smem constant byte address 0x4 - core index']
  #allocation1 [shape = 'u32[144,128]{1,0:T(1,128)}', space=vmem, size = 0x12000, scoped, tag = 'internal scratch']
  %s0 = inlined_call_operand.vmem [shape: f32[8,32], index: 0, kind: input, shape index: {}]
  %s1 = inlined_call_operand.hbm [shape: f32[8,32], index: 1, kind: input, shape index: {}]
  %s2 = inlined_call_operand.vmem [shape: f32[8,1], index: 2, kind: input, shape index: {}]
  %s3 = inlined_call_operand.hbm [shape: f32[1,8,128], index: 3, kind: output, shape index: {}]
  %s4 = sld [smem:[#allocation0]]
  $region26: #{tpu_custom_call.1} parent=0
    _
  %s6 = ssub.s32 1, %s4
  %s7 = scalar_select 0, %s6, %s4
  $region1: #{tpu_custom_call.1} parent=0
    #allocation2 [shape = 'u8[4096]{0}', space=vmem, size = 0x1000, scoped, tag = 'input window, operand 1, single buffered']
    #allocation3 [shape = 's32[1]{0}', space=sflag, size = 0x4, scoped, tag = 'scoped memory for tpu_custom_call.1']
    #allocation4 [shape = 's32[1]{0}', space=sflag, size = 0x4, scoped, tag = 'scoped memory for tpu_custom_call.1']
    #allocation5 [shape = 'u8[4096]{0}', space=vmem, size = 0x1000, scoped, tag = 'output window, operand 0, single buffered']
    %8 = vsyncpa [#allocation3], 0
    %9 = vsyncpa [#allocation4], 0
    // Predicated region
    $region2: #{tpu_custom_call.1} parent=1 // pred_check
      _
    $region3: #{tpu_custom_call.1} parent=1 // pred_check_branch
      %11 = sbr.rel (0) target = $region5
    $region4: #{tpu_custom_call.1} parent=1 // pred_region
      _
    $region5: #{tpu_custom_call.1} parent=1 // pred_fallthru
      _
    // Predicated region
    $region6: #{tpu_custom_call.1} parent=1 // pred_check
      _
    $region7: #{tpu_custom_call.1} parent=1 // pred_check_branch
      %13 = sbr.rel (0) target = $region9
    $region8: #{tpu_custom_call.1} parent=1 // pred_region
      %s15 = ssub.s32 128, 128
      %16 = vsyncadd [#allocation3], %s15
      %s18 = sshll.u32 [#allocation2], 4
      %s19 = int_to_ptr.vmem [resolvable:$true] %s18
      %21 = dma.hbm_to_vmem [thread:$0]  %s1, 128, %s19, [#allocation3]
    $region9: #{tpu_custom_call.1} parent=1 // pred_fallthru
      _
    // Predicated region
    $region10: #{tpu_custom_call.1} parent=1 // pred_check
      _
    $region11: #{tpu_custom_call.1} parent=1 // pred_check_branch
      %23 = sbr.rel (0) target = $region13
    $region12: #{tpu_custom_call.1} parent=1 // pred_region
      _
    $region13: #{tpu_custom_call.1} parent=1 // pred_fallthru
      _
    // Predicated region
    $region14: #{tpu_custom_call.1} parent=1 // pred_check
      _
    $region15: #{tpu_custom_call.1} parent=1 // pred_check_branch
      %25 = sbr.rel (0) target = $region17
    $region16: #{tpu_custom_call.1} parent=1 // pred_region
      %26 = dma.done [#allocation3], 128
    $region17: #{tpu_custom_call.1} parent=1 // pred_fallthru
      _
    %v27 = vld [vmem:[%s0] sm:$0xff]
    %v28 = vld [vmem:[#allocation2] sm:$0xff]
    %v29 = vsub.f32 %v27, %v28
    %v30 = vadd.f32 %v29, 1e-06
    %v31 = vmul.f32 %v30, %v30
    %vm32 = vcmask 261120
    %v33 = vsel %vm32, %v31, 0.0
    %34 = vadd.xlane.f32.xlu0 %v33
    %v35 = vpop.xlane.xlu0 %34
    %v36 = vrsqrt.pop %v35
    %v37 = vmul.f32 %v35, %v36
    %vm38 = vcmp.eq.f32.partialorder %v35, inf
    %v39 = vsel %vm38, %v35, %v37
    %vm40 = vcmp.eq.f32.partialorder %v35, 0.0
    %v41 = vand.u32 %v35, 2147483648
    %v42 = vsel %vm40, %v41, %v39
    %v43 = vld [vmem:[%s2] sm:$0xff]
    %v44 = vsub.f32 2.0, %v42
    %v45 = vmax.f32 %v44, 0.0
    %v46 = vsub.f32 1.0, %v43
    %v47 = vmul.f32 %v46, %v35
    %v48 = vmul.f32 %v45, %v45
    %v49 = vmul.f32 %v43, %v48
    %v50 = vadd.f32 %v47, %v49
    %s51 = smul.u32 0, 8
    %v52 = vlaneseq
    %v53 = vshrl.u32 %v52, 7
    %v54 = vstv %s51
    %v55 = vadd.s32 %v54, %v53
    %vm56 = vcmp.lt.s32.totalorder %v55, 8
    %v57 = vsel %vm56, %v50, 0.0
    %vm58 = vcmask 7168
    %v59 = vsel %vm58, %v57, 0.0
    %v60 = vrot.slane %v59, 4
    %v61 = vadd.f32 %v59, %v60
    %v62 = vrot.slane %v61, 2
    %v63 = vadd.f32 %v61, %v62
    %v64 = vrot.slane %v63, 1
    %v65 = vadd.f32 %v63, %v64
    %67 = vset.pattern.permute.xlu0 0
    %68 = vperm.xlu0 %67, %v65
    %v69 = vpop.permute.xlu0 %68
    %71 = vst [vmem:[#allocation5] sm:$0xff] %v69
    // Predicated region
    $region18: #{tpu_custom_call.1} parent=1 // pred_check
      _
    $region19: #{tpu_custom_call.1} parent=1 // pred_check_branch
      %73 = sbr.rel (0) target = $region21
    $region20: #{tpu_custom_call.1} parent=1 // pred_region
      %s75 = ssub.s32 128, 128
      %76 = vsyncadd [#allocation4], %s75
      %s78 = sshll.u32 [#allocation5], 4
      %s79 = int_to_ptr.vmem [resolvable:$true] %s78
      %81 = dma.vmem_to_hbm [thread:$0]  %s79, 128, %s3, [#allocation4]
    $region21: #{tpu_custom_call.1} parent=1 // pred_fallthru
      _
    // Predicated region
    $region22: #{tpu_custom_call.1} parent=1 // pred_check
      _
    $region23: #{tpu_custom_call.1} parent=1 // pred_check_branch
      %83 = sbr.rel (0) target = $region25
    $region24: #{tpu_custom_call.1} parent=1 // pred_region
      %84 = dma.done [#allocation4], 128
    $region25: #{tpu_custom_call.1} parent=1 // pred_fallthru
      _
    %85 = vsyncpa [#allocation3], 1
    %86 = vsyncpa [#allocation4], 1

</llo_original>
